<compile_context>
chip_gen: v7x
topology: tpu7x:2x2x1
jax: 0.10.0
libtpu: 0.0.40
codegen_flags: <defaults>
</compile_context>

<pallas_src>
import functools

import jax
import jax.numpy as jnp
from jax.experimental import pallas as pl
from jax.experimental.pallas import tpu as pltpu

COMPUTE_DTYPE = jnp.float32  # use jnp.bfloat16 on v6e/v7x for the big MXU


def _round_up(x, m):
    return (x + m - 1) // m * m


# -----------------------------------------------------------------------------
# Pallas kernel: generic z/ctx-conditioned token decoder
# -----------------------------------------------------------------------------
def _decoder_kernel(tok_ref, add_ref, wth_ref, who_ref, bo_ref, out_ref,
                    h_scratch):
    """One (TILE_M, TILE_N) logits tile.

    tok_ref: (TILE_M, E)     flattened token embeddings
    add_ref: (TILE_M, H)     precomputed per-row additive (z/ctx proj + bias)
    wth_ref: (E, H)          input-to-hidden weight (full)
    who_ref: (H, TILE_N)     hidden-to-vocab weight tile
    bo_ref : (1, TILE_N)     output bias tile
    out_ref: (TILE_M, TILE_N) logits tile
    h_scratch: (TILE_M, H)   VMEM scratch; hidden reused across vocab tiles
    """
    # Hidden activations only depend on the M tile: compute once per M tile
    # (vocab axis is the inner, "arbitrary" grid axis) and cache in VMEM.
    @pl.when(pl.program_id(1) == 0)
    def _():
        h_scratch[...] = jnp.tanh(
            jnp.dot(tok_ref[...], wth_ref[...],
                    preferred_element_type=jnp.float32)
            + add_ref[...])

    out_ref[...] = (jnp.dot(h_scratch[...].astype(who_ref.dtype), who_ref[...],
                            preferred_element_type=jnp.float32)
                    + bo_ref[...]).astype(out_ref.dtype)


# -----------------------------------------------------------------------------
# pallas_call wrapper for one decoder (shared by LM and TM)
# -----------------------------------------------------------------------------
def decoder_forward(tok_embed, add_bh, W_th, W_ho, b_o, *,
                    tile_m=128, tile_n=128, compute_dtype=COMPUTE_DTYPE):
    """logits[b, t, :] = tanh(tok_embed[b, t] @ W_th + add_bh[b]) @ W_ho + b_o."""
    B, T, E = tok_embed.shape
    H = W_th.shape[1]
    V = W_ho.shape[1]

    M = B * T
    M_pad = _round_up(M, tile_m)
    V_pad = _round_up(V, tile_n)

    # Flatten (B, T) -> M and broadcast the per-batch additive to per-row.
    tok_flat = tok_embed.reshape(M, E)
    add_flat = jnp.broadcast_to(add_bh[:, None, :], (B, T, H)).reshape(M, H)

    if M_pad != M:
        tok_flat = jnp.pad(tok_flat, ((0, M_pad - M), (0, 0)))
        add_flat = jnp.pad(add_flat, ((0, M_pad - M), (0, 0)))
    if V_pad != V:  # lane-dense output: vocab padded to a multiple of 128
        W_ho = jnp.pad(W_ho, ((0, 0), (0, V_pad - V)))
        b_o = jnp.pad(b_o, ((0, 0), (0, V_pad - V)))

    tok_flat = tok_flat.astype(compute_dtype)
    W_th = W_th.astype(compute_dtype)
    W_ho = W_ho.astype(compute_dtype)
    add_flat = add_flat.astype(jnp.float32)
    b_o = b_o.astype(jnp.float32)

    num_m = M_pad // tile_m
    num_n = V_pad // tile_n

    out = pl.pallas_call(
        _decoder_kernel,
        out_shape=jax.ShapeDtypeStruct((M_pad, V_pad), jnp.float32),
        grid_spec=pltpu.PrefetchScalarGridSpec(
            num_scalar_prefetch=0,
            grid=(num_m, num_n),
            in_specs=[
                pl.BlockSpec((tile_m, E), lambda m, n: (m, 0)),
                pl.BlockSpec((tile_m, H), lambda m, n: (m, 0)),
                pl.BlockSpec((E, H), lambda m, n: (0, 0)),
                pl.BlockSpec((H, tile_n), lambda m, n: (0, n)),
                pl.BlockSpec((1, tile_n), lambda m, n: (0, n)),
            ],
            out_specs=pl.BlockSpec((tile_m, tile_n), lambda m, n: (m, n)),
            scratch_shapes=[pltpu.VMEM((tile_m, H), jnp.float32)],
        ),
        compiler_params=pltpu.CompilerParams(
            # M tiles are independent (megacore-shardable on v7x); the vocab
            # axis must stay on one core per M tile because of the h scratch.
            dimension_semantics=("parallel", "arbitrary"),
            # NOTE: at realistic H/V sizes, raise vmem_limit_bytes here and
            # shrink tile_n so 2 * H * tile_n * bytes stays within budget.
        ),
    )(tok_flat, add_flat, W_th, W_ho, b_o)

    return out[:M, :V].reshape(B, T, V)


# -----------------------------------------------------------------------------
# AEVNMT.forward equivalent
# -----------------------------------------------------------------------------
def aevnmt_forward(x, seq_mask_x, seq_len_x, y, z, params):
    """Returns (tm_logits, lm_logits, state, aux_lm_likelihoods, aux_tm_likelihoods)."""
    del seq_len_x  # length information is carried by seq_mask_x here

    # Embedding lookups (glue, plain JAX gather).
    x_embed = jnp.take(params["src_emb"], x, axis=0)   # [B, Tx, E]
    y_embed = jnp.take(params["tgt_emb"], y, axis=0)   # [B, Ty, E]
    B, Tx, _ = x_embed.shape
    Ty = y_embed.shape[1]

    # --- hoisted M=1 projections (batched XLA matmuls, not per-grid-step) ---
    # LM: z-conditioned additive.
    lm_add = z @ params["lm_Wzh"] + params["lm_bh"]                     # [B, H]

    # TM: uniform attention over valid source tokens -> mean-pooled context.
    mask = seq_mask_x.astype(jnp.float32)                               # [B, Tx]
    att_row = mask / jnp.sum(mask, axis=-1, keepdims=True)              # [B, Tx]
    ctx = jnp.einsum("bt,bte->be", att_row, x_embed)                    # [B, E]
    tm_add = (z @ params["tm_Wzh"] + ctx @ params["tm_Wch"]
              + params["tm_bh"])                                        # [B, H]

    # --- Pallas decoders ---
    lm_logits = decoder_forward(x_embed, lm_add,
                                params["lm_Wxh"], params["lm_Who"],
                                params["lm_bo"])                        # [B,Tx,Vx]
    tm_logits = decoder_forward(y_embed, tm_add,
                                params["tm_Wyh"], params["tm_Who"],
                                params["tm_bo"])                        # [B,Ty,Vy]

    # Attention weights broadcast in the wrapper (no redundant HBM writes).
    att_weights = jnp.broadcast_to(att_row[:, None, :], (B, Ty, Tx))
    state = {"att_weights": att_weights}

    # TODO(synk): aux_lms / aux_tms default to empty ModuleDicts in the
    # reference module, so the aux likelihood dicts are empty here.
    return tm_logits, lm_logits, state, {}, {}


# -----------------------------------------------------------------------------
# Pure-JAX reference (for correctness check)
# -----------------------------------------------------------------------------
def reference_forward(x, seq_mask_x, y, z, params):
    x_embed = jnp.take(params["src_emb"], x, axis=0)
    y_embed = jnp.take(params["tgt_emb"], y, axis=0)

    h_lm = jnp.tanh(jnp.einsum("bte,eh->bth", x_embed, params["lm_Wxh"])
                    + (z @ params["lm_Wzh"])[:, None, :] + params["lm_bh"])
    lm_logits = jnp.einsum("bth,hv->btv", h_lm, params["lm_Who"]) + params["lm_bo"]

    mask = seq_mask_x.astype(jnp.float32)
    att = mask / jnp.sum(mask, axis=-1, keepdims=True)                  # [B, Tx]
    ctx = jnp.einsum("bt,bte->be", att, x_embed)                        # [B, E]
    h_tm = jnp.tanh(jnp.einsum("bte,eh->bth", y_embed, params["tm_Wyh"])
                    + (z @ params["tm_Wzh"])[:, None, :]
                    + (ctx @ params["tm_Wch"])[:, None, :]
                    + params["tm_bh"])
    tm_logits = jnp.einsum("bth,hv->btv", h_tm, params["tm_Who"]) + params["tm_bo"]
    att_w = jnp.broadcast_to(att[:, None, :],
                             (att.shape[0], y.shape[1], att.shape[1]))
    return tm_logits, lm_logits, att_w


# -----------------------------------------------------------------------------
# main
# -----------------------------------------------------------------------------
def make_params(key, Vx, Vy, E, D, H):
    ks = jax.random.split(key, 12)
    s = 0.1
    return {
        "src_emb": s * jax.random.normal(ks[0], (Vx, E), jnp.float32),
        "tgt_emb": s * jax.random.normal(ks[1], (Vy, E), jnp.float32),
        "lm_Wxh": s * jax.random.normal(ks[2], (E, H), jnp.float32),
        "lm_Wzh": s * jax.random.normal(ks[3], (D, H), jnp.float32),
        "lm_bh": s * jax.random.normal(ks[4], (1, H), jnp.float32),
        "lm_Who": s * jax.random.normal(ks[5], (H, Vx), jnp.float32),
        "lm_bo": s * jax.random.normal(ks[6], (1, Vx), jnp.float32),
        "tm_Wyh": s * jax.random.normal(ks[7], (E, H), jnp.float32),
        "tm_Wzh": s * jax.random.normal(ks[8], (D, H), jnp.float32),
        "tm_Wch": s * jax.random.normal(ks[9], (E, H), jnp.float32),
        "tm_bh": s * jax.random.normal(ks[10], (1, H), jnp.float32),
        "tm_Who": s * jax.random.normal(ks[11], (H, Vy), jnp.float32),
        "tm_bo": jnp.zeros((1, Vy), jnp.float32),
    }


if __name__ == "__main__":
    B, Tx, Ty = 2, 8, 8
    E, D, H = 32, 16, 32
    Vx, Vy = 48, 56

    key = jax.random.PRNGKey(0)
    kp, kx, ky, kz = jax.random.split(key, 4)

    params = make_params(kp, Vx, Vy, E, D, H)

    x = jax.random.randint(kx, (B, Tx), 0, Vx, dtype=jnp.int32)
    y = jax.random.randint(ky, (B, Ty), 0, Vy, dtype=jnp.int32)
    seq_len_x = jnp.array([Tx, Tx - 3], dtype=jnp.int32)
    seq_mask_x = (jnp.arange(Tx)[None, :] < seq_len_x[:, None]).astype(jnp.float32)
    z = jax.random.normal(kz, (B, D), jnp.float32)

    fwd = jax.jit(functools.partial(aevnmt_forward, params=params))
    tm_logits, lm_logits, state, aux_lm, aux_tm = fwd(
        x, seq_mask_x, seq_len_x, y, z)
    jax.block_until_ready((tm_logits, lm_logits, state["att_weights"]))

    # correctness check against pure-JAX reference
    tm_ref, lm_ref, att_ref = reference_forward(x, seq_mask_x, y, z, params)
    assert tm_logits.shape == (B, Ty, Vy)
    assert lm_logits.shape == (B, Tx, Vx)
    assert state["att_weights"].shape == (B, Ty, Tx)
    assert jnp.allclose(tm_logits, tm_ref, atol=1e-5, rtol=1e-5)
    assert jnp.allclose(lm_logits, lm_ref, atol=1e-5, rtol=1e-5)
    assert jnp.allclose(state["att_weights"], att_ref, atol=1e-5, rtol=1e-5)
    assert aux_lm == {} and aux_tm == {}

    print("KERNEL_OK")
</pallas_src>

<mosaic_0001>
module attributes {stable_mosaic.version = 11 : i64} {
  func.func @_decoder_kernel(%arg0: i32, %arg1: i32, %arg2: memref<128x32xf32, #tpu.memory_space<vmem>>, %arg3: memref<128x32xf32, #tpu.memory_space<vmem>>, %arg4: memref<32x32xf32, #tpu.memory_space<vmem>>, %arg5: memref<32x128xf32, #tpu.memory_space<vmem>>, %arg6: memref<1x128xf32, #tpu.memory_space<vmem>>, %arg7: memref<128x128xf32, #tpu.memory_space<vmem>>, %arg8: memref<128x32xf32, #tpu.memory_space<vmem>>) attributes {dimension_semantics = [#tpu.dimension_semantics<parallel>, #tpu.dimension_semantics<arbitrary>], iteration_bounds = array<i64: 1, 1>, scalar_prefetch = 0 : i64, scratch_operands = 1 : i64, tpu.core_type = #tpu.core_type<tc>, window_params = [{transform_indices = @transform_0, window_bounds = array<i64: 128, 32>}, {transform_indices = @transform_1, window_bounds = array<i64: 128, 32>}, {pipeline_mode = #tpu.pipeline_mode<synchronous>, transform_indices = @transform_2, window_bounds = array<i64: 32, 32>}, {transform_indices = @transform_3, window_bounds = array<i64: 32, 128>}, {transform_indices = @transform_4, window_bounds = array<i64: 1, 128>}, {transform_indices = @transform_5, window_bounds = array<i64: 128, 128>}]} {
    %c0_i32 = arith.constant 0 : i32
    %0 = arith.cmpi eq, %arg1, %c0_i32 : i32
    %1 = arith.extui %0 : i1 to i32
    %c0_i32_0 = arith.constant 0 : i32
    %2 = arith.cmpi ne, %1, %c0_i32_0 : i32
    scf.if %2 {
      %c0_8 = arith.constant 0 : index
      %c0_9 = arith.constant 0 : index
      %10 = vector.load %arg2[%c0_8, %c0_9] : memref<128x32xf32, #tpu.memory_space<vmem>>, vector<128x32xf32>
      %c0_10 = arith.constant 0 : index
      %c0_11 = arith.constant 0 : index
      %11 = vector.load %arg4[%c0_10, %c0_11] : memref<32x32xf32, #tpu.memory_space<vmem>>, vector<32x32xf32>
      %cst_12 = arith.constant dense<0.000000e+00> : vector<128x32xf32>
      %12 = tpu.matmul %10, %11, %cst_12 {dimension_numbers = #tpu.dot_dimension_numbers<[1], [0], [0], [1], [0, 0, 1, 1], [], []>} : vector<128x32xf32>, vector<32x32xf32>, vector<128x32xf32> -> vector<128x32xf32>
      %c0_13 = arith.constant 0 : index
      %c0_14 = arith.constant 0 : index
      %13 = vector.load %arg3[%c0_13, %c0_14] : memref<128x32xf32, #tpu.memory_space<vmem>>, vector<128x32xf32>
      %14 = arith.addf %12, %13 : vector<128x32xf32>
      %15 = math.tanh %14 : vector<128x32xf32>
      %c0_15 = arith.constant 0 : index
      %c0_16 = arith.constant 0 : index
      %16 = vector.load %arg8[%c0_15, %c0_16] : memref<128x32xf32, #tpu.memory_space<vmem>>, vector<128x32xf32>
      tpu.vector_store %arg8[%c0_15, %c0_16], %15 {strides = array<i32>} : memref<128x32xf32, #tpu.memory_space<vmem>>, vector<128x32xf32>,
    } else {
    }
    %c0 = arith.constant 0 : index
    %c0_1 = arith.constant 0 : index
    %3 = vector.load %arg8[%c0, %c0_1] : memref<128x32xf32, #tpu.memory_space<vmem>>, vector<128x32xf32>
    %c0_2 = arith.constant 0 : index
    %c0_3 = arith.constant 0 : index
    %4 = vector.load %arg5[%c0_2, %c0_3] : memref<32x128xf32, #tpu.memory_space<vmem>>, vector<32x128xf32>
    %cst = arith.constant dense<0.000000e+00> : vector<128x128xf32>
    %5 = tpu.matmul %3, %4, %cst {dimension_numbers = #tpu.dot_dimension_numbers<[1], [0], [0], [1], [0, 0, 1, 1], [], []>} : vector<128x32xf32>, vector<32x128xf32>, vector<128x128xf32> -> vector<128x128xf32>
    %c0_4 = arith.constant 0 : index
    %c0_5 = arith.constant 0 : index
    %6 = vector.load %arg6[%c0_4, %c0_5] : memref<1x128xf32, #tpu.memory_space<vmem>>, vector<1x128xf32>
    %7 = vector.broadcast %6 : vector<1x128xf32> to vector<128x128xf32>
    %8 = arith.addf %5, %7 : vector<128x128xf32>
    %c0_6 = arith.constant 0 : index
    %c0_7 = arith.constant 0 : index
    %9 = vector.load %arg7[%c0_6, %c0_7] : memref<128x128xf32, #tpu.memory_space<vmem>>, vector<128x128xf32>
    tpu.vector_store %arg7[%c0_6, %c0_7], %8 {strides = array<i32>} : memref<128x128xf32, #tpu.memory_space<vmem>>, vector<128x128xf32>,
    return
  }
  func.func @transform_0(%arg0: i32, %arg1: i32) -> (i32, i32) {
    %c0_i32 = arith.constant 0 : i32
    %c0_i32_0 = arith.constant 0 : i32
    return %arg0, %c0_i32 : i32, i32
  }
  func.func @transform_1(%arg0: i32, %arg1: i32) -> (i32, i32) {
    %c0_i32 = arith.constant 0 : i32
    %c0_i32_0 = arith.constant 0 : i32
    return %arg0, %c0_i32 : i32, i32
  }
  func.func @transform_2(%arg0: i32, %arg1: i32) -> (i32, i32) {
    %c0_i32 = arith.constant 0 : i32
    %c0_i32_0 = arith.constant 0 : i32
    %c0_i32_1 = arith.constant 0 : i32
    return %c0_i32, %c0_i32_0 : i32, i32
  }
  func.func @transform_3(%arg0: i32, %arg1: i32) -> (i32, i32) {
    %c0_i32 = arith.constant 0 : i32
    %c0_i32_0 = arith.constant 0 : i32
    return %c0_i32, %arg1 : i32, i32
  }
  func.func @transform_4(%arg0: i32, %arg1: i32) -> (i32, i32) {
    %c0_i32 = arith.constant 0 : i32
    %c0_i32_0 = arith.constant 0 : i32
    return %c0_i32, %arg1 : i32, i32
  }
  func.func @transform_5(%arg0: i32, %arg1: i32) -> (i32, i32) {
    %c0_i32 = arith.constant 0 : i32
    return %arg0, %arg1 : i32, i32
  }
}

</mosaic_0001>

<llo_original>
// kernel: aevnmt_forward.3
$region0: #{aevnmt_forward.3}
  #allocation0 [shape = 'u32[]', space=smem, size = 0x4, offset = 0x4, fixed_abs, tag = 'smem constant byte address 0x4 - core index']
  #allocation1 [shape = 'u32[144,128]{1,0:T(1,128)}', space=vmem, size = 0x12000, scoped, tag = 'internal scratch']
  #allocation2 [shape = 'f32[128,32]{1,0:T(8,128)}', space=vmem, size = 0x10000, scoped, tag = 'scratch operand']
  %s0 = inlined_call_operand.vmem [shape: f32[128,32], index: 0, kind: input, shape index: {}]
  %s1 = inlined_call_operand.vmem [shape: f32[128,32], index: 1, kind: input, shape index: {}]
  %s2 = inlined_call_operand.vmem [shape: f32[32,32], index: 2, kind: input, shape index: {}]
  %s3 = inlined_call_operand.vmem [shape: f32[32,128], index: 3, kind: input, shape index: {}]
  %s4 = inlined_call_operand.vmem [shape: f32[1,128], index: 4, kind: input, shape index: {}]
  %s5 = inlined_call_operand.vmem [shape: f32[128,128], index: 5, kind: output, shape index: {}]
  %s6 = sld [smem:[#allocation0]]
  $region34: #{aevnmt_forward.3} parent=0
    _
  %s8 = ssub.s32 1, %s6
  %s9 = scalar_select 0, %s8, %s6
  // Predicated region
  $region2: #{aevnmt_forward.3} parent=0 // pred_check
    _
  $region3: #{aevnmt_forward.3} parent=0 // pred_check_branch
    %11 = sbr.rel (0) target = $region5
  $region4: #{aevnmt_forward.3} parent=0 // pred_region
    _
  $region5: #{aevnmt_forward.3} parent=0 // pred_fallthru
    _
  // Predicated region
  $region6: #{aevnmt_forward.3} parent=0 // pred_check
    _
  $region7: #{aevnmt_forward.3} parent=0 // pred_check_branch
    %13 = sbr.rel (0) target = $region9
  $region8: #{aevnmt_forward.3} parent=0 // pred_region
    _
  $region9: #{aevnmt_forward.3} parent=0 // pred_fallthru
    _
  // Predicated region
  $region10: #{aevnmt_forward.3} parent=0 // pred_check
    _
  $region11: #{aevnmt_forward.3} parent=0 // pred_check_branch
    %15 = sbr.rel (0) target = $region13
  $region12: #{aevnmt_forward.3} parent=0 // pred_region
    _
  $region13: #{aevnmt_forward.3} parent=0 // pred_fallthru
    _
  // Predicated region
  $region14: #{aevnmt_forward.3} parent=0 // pred_check
    _
  $region15: #{aevnmt_forward.3} parent=0 // pred_check_branch
    %17 = sbr.rel (0) target = $region17
  $region16: #{aevnmt_forward.3} parent=0 // pred_region
    _
  $region17: #{aevnmt_forward.3} parent=0 // pred_fallthru
    _
  // Predicated region
  $region18: #{aevnmt_forward.3} parent=0 // pred_check
    _
  $region19: #{aevnmt_forward.3} parent=0 // pred_check_branch
    %19 = sbr.rel (0) target = $region21
  $region20: #{aevnmt_forward.3} parent=0 // pred_region
    _
  $region21: #{aevnmt_forward.3} parent=0 // pred_fallthru
    _
  %p20 = scmp.eq.s32.totalorder 0, 0
  // Predicated region
  $region22: #{aevnmt_forward.3} parent=0 // pred_check
    %p21 = pneg %p20
  $region23: #{aevnmt_forward.3} parent=0 // pred_check_branch
    %23 = sbr.rel (%p21) target = $region25
  $region24: #{aevnmt_forward.3} parent=0 // pred_region
    %v24 = vld [vmem:[%s0] sm:$0xff]
    %v25 = vld [vmem:[%s0 + $0x8] sm:$0xff]
    %v26 = vld [vmem:[%s0 + $0x10] sm:$0xff]
    %v27 = vld [vmem:[%s0 + $0x18] sm:$0xff]
    %v28 = vld [vmem:[%s0 + $0x20] sm:$0xff]
    %v29 = vld [vmem:[%s0 + $0x28] sm:$0xff]
    %v30 = vld [vmem:[%s0 + $0x30] sm:$0xff]
    %v31 = vld [vmem:[%s0 + $0x38] sm:$0xff]
    %v32 = vld [vmem:[%s0 + $0x40] sm:$0xff]
    %v33 = vld [vmem:[%s0 + $0x48] sm:$0xff]
    %v34 = vld [vmem:[%s0 + $0x50] sm:$0xff]
    %v35 = vld [vmem:[%s0 + $0x58] sm:$0xff]
    %v36 = vld [vmem:[%s0 + $0x60] sm:$0xff]
    %v37 = vld [vmem:[%s0 + $0x68] sm:$0xff]
    %v38 = vld [vmem:[%s0 + $0x70] sm:$0xff]
    %v39 = vld [vmem:[%s0 + $0x78] sm:$0xff]
    %v40 = vld [vmem:[%s2] sm:$0xff]
    %v41 = vld [vmem:[%s2 + $0x8] sm:$0xff]
    %v42 = vld [vmem:[%s2 + $0x10] sm:$0xff]
    %v43 = vld [vmem:[%s2 + $0x18] sm:$0xff]
    %v44 = vld [vmem:[%s1] sm:$0xff]
    %v45 = vld [vmem:[%s1 + $0x8] sm:$0xff]
    %v46 = vld [vmem:[%s1 + $0x10] sm:$0xff]
    %v47 = vld [vmem:[%s1 + $0x18] sm:$0xff]
    %v48 = vld [vmem:[%s1 + $0x20] sm:$0xff]
    %v49 = vld [vmem:[%s1 + $0x28] sm:$0xff]
    %v50 = vld [vmem:[%s1 + $0x30] sm:$0xff]
    %v51 = vld [vmem:[%s1 + $0x38] sm:$0xff]
    %v52 = vld [vmem:[%s1 + $0x40] sm:$0xff]
    %v53 = vld [vmem:[%s1 + $0x48] sm:$0xff]
    %v54 = vld [vmem:[%s1 + $0x50] sm:$0xff]
    %v55 = vld [vmem:[%s1 + $0x58] sm:$0xff]
    %v56 = vld [vmem:[%s1 + $0x60] sm:$0xff]
    %v57 = vld [vmem:[%s1 + $0x68] sm:$0xff]
    %v58 = vld [vmem:[%s1 + $0x70] sm:$0xff]
    %v59 = vld [vmem:[%s1 + $0x78] sm:$0xff]
    %vm60 = vcmask 261120
    %v62 = vsel %vm60, %v24, 0
    %v65 = vsel %vm60, %v25, 0
    %v68 = vsel %vm60, %v26, 0
    %v71 = vsel %vm60, %v27, 0
    %v74 = vsel %vm60, %v28, 0
    %v77 = vsel %vm60, %v29, 0
    %v80 = vsel %vm60, %v30, 0
    %v83 = vsel %vm60, %v31, 0
    %v86 = vsel %vm60, %v32, 0
    %v89 = vsel %vm60, %v33, 0
    %v92 = vsel %vm60, %v34, 0
    %v95 = vsel %vm60, %v35, 0
    %v98 = vsel %vm60, %v36, 0
    %v101 = vsel %vm60, %v37, 0
    %v104 = vsel %vm60, %v38, 0
    %v107 = vsel %vm60, %v39, 0
    %109 = vmatprep.subr.mxu0 0.0
    %110 = vmatpush1.msra.mxu0 %v40
    %111 = vmatprep.subr.mxu0 0.0
    %112 = vmatpush1.msra.mxu0 %v41
    %113 = vmatprep.subr.mxu0 0.0
    %114 = vmatpush1.msra.mxu0 %v42
    %115 = vmatprep.subr.mxu0 0.0
    %116 = vmatpush1.msra.mxu0 %v43
    %117 = vmatprep.subr.mxu0 0.0
    %118 = vmatpush1.msra.mxu0 0.0
    %119 = vmatprep.subr.mxu0 0.0
    %120 = vmatpush1.msra.mxu0 0.0
    %121 = vmatprep.subr.mxu0 0.0
    %122 = vmatpush1.msra.mxu0 0.0
    %123 = vmatprep.subr.mxu0 0.0
    %124 = vmatpush1.msra.mxu0 0.0
    %125 = vmatprep.subr.mxu0 0.0
    %126 = vmatpush1.msra.mxu0 0.0
    %127 = vmatprep.subr.mxu0 0.0
    %128 = vmatpush1.msra.mxu0 0.0
    %129 = vmatprep.subr.mxu0 0.0
    %130 = vmatpush1.msra.mxu0 0.0
    %131 = vmatprep.subr.mxu0 0.0
    %132 = vmatpush1.msra.mxu0 0.0
    %133 = vmatprep.subr.mxu0 0.0
    %134 = vmatpush1.msra.mxu0 0.0
    %135 = vmatprep.subr.mxu0 0.0
    %136 = vmatpush1.msra.mxu0 0.0
    %137 = vmatprep.subr.mxu0 0.0
    %138 = vmatpush1.msra.mxu0 0.0
    %139 = vmatprep.subr.mxu0 0.0
    %140 = vmatpush1.msra.mxu0 0.0
    %141 = vmatprep.subr.mxu0 0.0
    %142 = vmatpush1.msra.mxu0 0.0
    %143 = vmatprep.subr.mxu0 0.0
    %144 = vmatpush1.msra.mxu0 0.0
    %145 = vmatprep.subr.mxu0 0.0
    %146 = vmatpush1.msra.mxu0 0.0
    %147 = vmatprep.subr.mxu0 0.0
    %148 = vmatpush1.msra.mxu0 0.0
    %149 = vmatprep.subr.mxu0 0.0
    %150 = vmatpush1.msra.mxu0 0.0
    %151 = vmatprep.subr.mxu0 0.0
    %152 = vmatpush1.msra.mxu0 0.0
    %153 = vmatprep.subr.mxu0 0.0
    %154 = vmatpush1.msra.mxu0 0.0
    %155 = vmatprep.subr.mxu0 0.0
    %156 = vmatpush1.msra.mxu0 0.0
    %157 = vmatprep.subr.mxu0 0.0
    %158 = vmatpush1.msra.mxu0 0.0
    %159 = vmatprep.subr.mxu0 0.0
    %160 = vmatpush1.msra.mxu0 0.0
    %161 = vmatprep.subr.mxu0 0.0
    %162 = vmatpush1.msra.mxu0 0.0
    %163 = vmatprep.subr.mxu0 0.0
    %164 = vmatpush1.msra.mxu0 0.0
    %165 = vmatprep.subr.mxu0 0.0
    %166 = vmatpush1.msra.mxu0 0.0
    %167 = vmatprep.subr.mxu0 0.0
    %168 = vmatpush1.msra.mxu0 0.0
    %169 = vmatprep.subr.mxu0 0.0
    %170 = vmatpush1.msra.mxu0 0.0
    %171 = vmatprep.subr.mxu0 0.0
    %172 = vmatpush1.msra.mxu0 0.0
    %173 = vmatprep.mubr.f32.mxu0 0.0
    %174 = vmatmul.mubr.f32.gmra.mrb[0].mxu0 %v62
    %v175 = vpop.f32.mrb[0].mxu0
    %v176 = vadd.f32 %v44, %v175
    %v177 = vpop.f32.mrb[0].mxu0
    %178 = vmatprep.mubr.f32.mxu0 0.0
    %179 = vmatmul.mubr.f32.gmra.mrb[0].mxu0 %v65
    %v180 = vpop.f32.mrb[0].mxu0
    %v181 = vadd.f32 %v45, %v180
    %v182 = vpop.f32.mrb[0].mxu0
    %183 = vmatprep.mubr.f32.mxu0 0.0
    %184 = vmatmul.mubr.f32.gmra.mrb[0].mxu0 %v68
    %v185 = vpop.f32.mrb[0].mxu0
    %v186 = vadd.f32 %v46, %v185
    %v187 = vpop.f32.mrb[0].mxu0
    %188 = vmatprep.mubr.f32.mxu0 0.0
    %189 = vmatmul.mubr.f32.gmra.mrb[0].mxu0 %v71
    %v190 = vpop.f32.mrb[0].mxu0
    %v191 = vadd.f32 %v47, %v190
    %v192 = vpop.f32.mrb[0].mxu0
    %193 = vmatprep.mubr.f32.mxu0 0.0
    %194 = vmatmul.mubr.f32.gmra.mrb[0].mxu0 %v74
    %v195 = vpop.f32.mrb[0].mxu0
    %v196 = vadd.f32 %v48, %v195
    %v197 = vpop.f32.mrb[0].mxu0
    %198 = vmatprep.mubr.f32.mxu0 0.0
    %199 = vmatmul.mubr.f32.gmra.mrb[0].mxu0 %v77
    %v200 = vpop.f32.mrb[0].mxu0
    %v201 = vadd.f32 %v49, %v200
    %v202 = vpop.f32.mrb[0].mxu0
    %203 = vmatprep.mubr.f32.mxu0 0.0
    %204 = vmatmul.mubr.f32.gmra.mrb[0].mxu0 %v80
    %v205 = vpop.f32.mrb[0].mxu0
    %v206 = vadd.f32 %v50, %v205
    %v207 = vpop.f32.mrb[0].mxu0
    %208 = vmatprep.mubr.f32.mxu0 0.0
    %209 = vmatmul.mubr.f32.gmra.mrb[0].mxu0 %v83
    %v210 = vpop.f32.mrb[0].mxu0
    %v211 = vadd.f32 %v51, %v210
    %v212 = vpop.f32.mrb[0].mxu0
    %213 = vmatprep.mubr.f32.mxu0 0.0
    %214 = vmatmul.mubr.f32.gmra.mrb[0].mxu0 %v86
    %v215 = vpop.f32.mrb[0].mxu0
    %v216 = vadd.f32 %v52, %v215
    %v217 = vpop.f32.mrb[0].mxu0
    %218 = vmatprep.mubr.f32.mxu0 0.0
    %219 = vmatmul.mubr.f32.gmra.mrb[0].mxu0 %v89
    %v220 = vpop.f32.mrb[0].mxu0
    %v221 = vadd.f32 %v53, %v220
    %v222 = vpop.f32.mrb[0].mxu0
    %223 = vmatprep.mubr.f32.mxu0 0.0
    %224 = vmatmul.mubr.f32.gmra.mrb[0].mxu0 %v92
    %v225 = vpop.f32.mrb[0].mxu0
    %v226 = vadd.f32 %v54, %v225
    %v227 = vpop.f32.mrb[0].mxu0
    %228 = vmatprep.mubr.f32.mxu0 0.0
    %229 = vmatmul.mubr.f32.gmra.mrb[0].mxu0 %v95
    %v230 = vpop.f32.mrb[0].mxu0
    %v231 = vadd.f32 %v55, %v230
    %v232 = vpop.f32.mrb[0].mxu0
    %233 = vmatprep.mubr.f32.mxu0 0.0
    %234 = vmatmul.mubr.f32.gmra.mrb[0].mxu0 %v98
    %v235 = vpop.f32.mrb[0].mxu0
    %v236 = vadd.f32 %v56, %v235
    %v237 = vpop.f32.mrb[0].mxu0
    %238 = vmatprep.mubr.f32.mxu0 0.0
    %239 = vmatmul.mubr.f32.gmra.mrb[0].mxu0 %v101
    %v240 = vpop.f32.mrb[0].mxu0
    %v241 = vadd.f32 %v57, %v240
    %v242 = vpop.f32.mrb[0].mxu0
    %243 = vmatprep.mubr.f32.mxu0 0.0
    %244 = vmatmul.mubr.f32.gmra.mrb[0].mxu0 %v104
    %v245 = vpop.f32.mrb[0].mxu0
    %v246 = vadd.f32 %v58, %v245
    %v247 = vpop.f32.mrb[0].mxu0
    %248 = vmatprep.mubr.f32.mxu0 0.0
    %249 = vmatmul.mubr.f32.gmra.mrb[0].mxu0 %v107
    %v250 = vpop.f32.mrb[0].mxu0
    %v251 = vadd.f32 %v59, %v250
    %v252 = vpop.f32.mrb[0].mxu0
    %253 = vdwg.mxu0
    %v254 = vtanh.pop %v176
    %v255 = vtanh.pop %v181
    %v256 = vtanh.pop %v186
    %v257 = vtanh.pop %v191
    %v258 = vtanh.pop %v196
    %v259 = vtanh.pop %v201
    %v260 = vtanh.pop %v206
    %v261 = vtanh.pop %v211
    %v262 = vtanh.pop %v216
    %v263 = vtanh.pop %v221
    %v264 = vtanh.pop %v226
    %v265 = vtanh.pop %v231
    %v266 = vtanh.pop %v236
    %v267 = vtanh.pop %v241
    %v268 = vtanh.pop %v246
    %v269 = vtanh.pop %v251
    %270 = vst.msk [vmem:[#allocation2] sm:$0xff] %vm60, %v254
    %271 = vst.msk [vmem:[#allocation2 + $0x8] sm:$0xff] %vm60, %v255
    %272 = vst.msk [vmem:[#allocation2 + $0x10] sm:$0xff] %vm60, %v256
    %273 = vst.msk [vmem:[#allocation2 + $0x18] sm:$0xff] %vm60, %v257
    %274 = vst.msk [vmem:[#allocation2 + $0x20] sm:$0xff] %vm60, %v258
    %275 = vst.msk [vmem:[#allocation2 + $0x28] sm:$0xff] %vm60, %v259
    %276 = vst.msk [vmem:[#allocation2 + $0x30] sm:$0xff] %vm60, %v260
    %277 = vst.msk [vmem:[#allocation2 + $0x38] sm:$0xff] %vm60, %v261
    %278 = vst.msk [vmem:[#allocation2 + $0x40] sm:$0xff] %vm60, %v262
    %279 = vst.msk [vmem:[#allocation2 + $0x48] sm:$0xff] %vm60, %v263
    %280 = vst.msk [vmem:[#allocation2 + $0x50] sm:$0xff] %vm60, %v264
    %281 = vst.msk [vmem:[#allocation2 + $0x58] sm:$0xff] %vm60, %v265
    %282 = vst.msk [vmem:[#allocation2 + $0x60] sm:$0xff] %vm60, %v266
    %283 = vst.msk [vmem:[#allocation2 + $0x68] sm:$0xff] %vm60, %v267
    %284 = vst.msk [vmem:[#allocation2 + $0x70] sm:$0xff] %vm60, %v268
    %285 = vst.msk [vmem:[#allocation2 + $0x78] sm:$0xff] %vm60, %v269
  $region25: #{aevnmt_forward.3} parent=0 // pred_fallthru
    _
  %v286 = vld [vmem:[#allocation2] sm:$0xff]
  %v287 = vld [vmem:[#allocation2 + $0x8] sm:$0xff]
  %v288 = vld [vmem:[#allocation2 + $0x10] sm:$0xff]
  %v289 = vld [vmem:[#allocation2 + $0x18] sm:$0xff]
  %v290 = vld [vmem:[#allocation2 + $0x20] sm:$0xff]
  %v291 = vld [vmem:[#allocation2 + $0x28] sm:$0xff]
  %v292 = vld [vmem:[#allocation2 + $0x30] sm:$0xff]
  %v293 = vld [vmem:[#allocation2 + $0x38] sm:$0xff]
  %v294 = vld [vmem:[#allocation2 + $0x40] sm:$0xff]
  %v295 = vld [vmem:[#allocation2 + $0x48] sm:$0xff]
  %v296 = vld [vmem:[#allocation2 + $0x50] sm:$0xff]
  %v297 = vld [vmem:[#allocation2 + $0x58] sm:$0xff]
  %v298 = vld [vmem:[#allocation2 + $0x60] sm:$0xff]
  %v299 = vld [vmem:[#allocation2 + $0x68] sm:$0xff]
  %v300 = vld [vmem:[#allocation2 + $0x70] sm:$0xff]
  %v301 = vld [vmem:[#allocation2 + $0x78] sm:$0xff]
  %v302 = vld [vmem:[%s3] sm:$0xff]
  %v303 = vld [vmem:[%s3 + $0x8] sm:$0xff]
  %v304 = vld [vmem:[%s3 + $0x10] sm:$0xff]
  %v305 = vld [vmem:[%s3 + $0x18] sm:$0xff]
  %v306 = vld [vmem:[%s4] sm:$0x1]
  %v308 = vlaneseq
  %v309 = vshrl.u32 %v308, 7
  %v310 = vsub.s32 0, %v309
  %v311 = vrot.slane %v306, %v310
  %vm313 = vcmask 261120
  %v315 = vsel %vm313, %v286, 0
  %v318 = vsel %vm313, %v287, 0
  %v321 = vsel %vm313, %v288, 0
  %v324 = vsel %vm313, %v289, 0
  %v327 = vsel %vm313, %v290, 0
  %v330 = vsel %vm313, %v291, 0
  %v333 = vsel %vm313, %v292, 0
  %v336 = vsel %vm313, %v293, 0
  %v339 = vsel %vm313, %v294, 0
  %v342 = vsel %vm313, %v295, 0
  %v345 = vsel %vm313, %v296, 0
  %v348 = vsel %vm313, %v297, 0
  %v351 = vsel %vm313, %v298, 0
  %v354 = vsel %vm313, %v299, 0
  %v357 = vsel %vm313, %v300, 0
  %v360 = vsel %vm313, %v301, 0
  %362 = vmatprep.subr.mxu0 0.0
  %363 = vmatpush1.msra.mxu0 %v302
  %364 = vmatprep.subr.mxu0 0.0
  %365 = vmatpush1.msra.mxu0 %v303
  %366 = vmatprep.subr.mxu0 0.0
  %367 = vmatpush1.msra.mxu0 %v304
  %368 = vmatprep.subr.mxu0 0.0
  %369 = vmatpush1.msra.mxu0 %v305
  %370 = vmatprep.subr.mxu0 0.0
  %371 = vmatpush1.msra.mxu0 0.0
  %372 = vmatprep.subr.mxu0 0.0
  %373 = vmatpush1.msra.mxu0 0.0
  %374 = vmatprep.subr.mxu0 0.0
  %375 = vmatpush1.msra.mxu0 0.0
  %376 = vmatprep.subr.mxu0 0.0
  %377 = vmatpush1.msra.mxu0 0.0
  %378 = vmatprep.subr.mxu0 0.0
  %379 = vmatpush1.msra.mxu0 0.0
  %380 = vmatprep.subr.mxu0 0.0
  %381 = vmatpush1.msra.mxu0 0.0
  %382 = vmatprep.subr.mxu0 0.0
  %383 = vmatpush1.msra.mxu0 0.0
  %384 = vmatprep.subr.mxu0 0.0
  %385 = vmatpush1.msra.mxu0 0.0
  %386 = vmatprep.subr.mxu0 0.0
  %387 = vmatpush1.msra.mxu0 0.0
  %388 = vmatprep.subr.mxu0 0.0
  %389 = vmatpush1.msra.mxu0 0.0
  %390 = vmatprep.subr.mxu0 0.0
  %391 = vmatpush1.msra.mxu0 0.0
  %392 = vmatprep.subr.mxu0 0.0
  %393 = vmatpush1.msra.mxu0 0.0
  %394 = vmatprep.subr.mxu0 0.0
  %395 = vmatpush1.msra.mxu0 0.0
  %396 = vmatprep.subr.mxu0 0.0
  %397 = vmatpush1.msra.mxu0 0.0
  %398 = vmatprep.subr.mxu0 0.0
  %399 = vmatpush1.msra.mxu0 0.0
  %400 = vmatprep.subr.mxu0 0.0
  %401 = vmatpush1.msra.mxu0 0.0
  %402 = vmatprep.subr.mxu0 0.0
  %403 = vmatpush1.msra.mxu0 0.0
  %404 = vmatprep.subr.mxu0 0.0
  %405 = vmatpush1.msra.mxu0 0.0
  %406 = vmatprep.subr.mxu0 0.0
  %407 = vmatpush1.msra.mxu0 0.0
  %408 = vmatprep.subr.mxu0 0.0
  %409 = vmatpush1.msra.mxu0 0.0
  %410 = vmatprep.subr.mxu0 0.0
  %411 = vmatpush1.msra.mxu0 0.0
  %412 = vmatprep.subr.mxu0 0.0
  %413 = vmatpush1.msra.mxu0 0.0
  %414 = vmatprep.subr.mxu0 0.0
  %415 = vmatpush1.msra.mxu0 0.0
  %416 = vmatprep.subr.mxu0 0.0
  %417 = vmatpush1.msra.mxu0 0.0
  %418 = vmatprep.subr.mxu0 0.0
  %419 = vmatpush1.msra.mxu0 0.0
  %420 = vmatprep.subr.mxu0 0.0
  %421 = vmatpush1.msra.mxu0 0.0
  %422 = vmatprep.subr.mxu0 0.0
  %423 = vmatpush1.msra.mxu0 0.0
  %424 = vmatprep.subr.mxu0 0.0
  %425 = vmatpush1.msra.mxu0 0.0
  %426 = vmatprep.mubr.f32.mxu0 0.0
  %427 = vmatmul.mubr.f32.gmra.mrb[0].mxu0 %v315
  %v428 = vpop.f32.mrb[0].mxu0
  %v429 = vadd.f32 %v311, %v428
  %v430 = vpop.f32.mrb[0].mxu0
  %431 = vmatprep.mubr.f32.mxu0 0.0
  %432 = vmatmul.mubr.f32.gmra.mrb[0].mxu0 %v318
  %v433 = vpop.f32.mrb[0].mxu0
  %v434 = vadd.f32 %v311, %v433
  %v435 = vpop.f32.mrb[0].mxu0
  %436 = vmatprep.mubr.f32.mxu0 0.0
  %437 = vmatmul.mubr.f32.gmra.mrb[0].mxu0 %v321
  %v438 = vpop.f32.mrb[0].mxu0
  %v439 = vadd.f32 %v311, %v438
  %v440 = vpop.f32.mrb[0].mxu0
  %441 = vmatprep.mubr.f32.mxu0 0.0
  %442 = vmatmul.mubr.f32.gmra.mrb[0].mxu0 %v324
  %v443 = vpop.f32.mrb[0].mxu0
  %v444 = vadd.f32 %v311, %v443
  %v445 = vpop.f32.mrb[0].mxu0
  %446 = vmatprep.mubr.f32.mxu0 0.0
  %447 = vmatmul.mubr.f32.gmra.mrb[0].mxu0 %v327
  %v448 = vpop.f32.mrb[0].mxu0
  %v449 = vadd.f32 %v311, %v448
  %v450 = vpop.f32.mrb[0].mxu0
  %451 = vmatprep.mubr.f32.mxu0 0.0
  %452 = vmatmul.mubr.f32.gmra.mrb[0].mxu0 %v330
  %v453 = vpop.f32.mrb[0].mxu0
  %v454 = vadd.f32 %v311, %v453
  %v455 = vpop.f32.mrb[0].mxu0
  %456 = vmatprep.mubr.f32.mxu0 0.0
  %457 = vmatmul.mubr.f32.gmra.mrb[0].mxu0 %v333
  %v458 = vpop.f32.mrb[0].mxu0
  %v459 = vadd.f32 %v311, %v458
  %v460 = vpop.f32.mrb[0].mxu0
  %461 = vmatprep.mubr.f32.mxu0 0.0
  %462 = vmatmul.mubr.f32.gmra.mrb[0].mxu0 %v336
  %v463 = vpop.f32.mrb[0].mxu0
  %v464 = vadd.f32 %v311, %v463
  %v465 = vpop.f32.mrb[0].mxu0
  %466 = vmatprep.mubr.f32.mxu0 0.0
  %467 = vmatmul.mubr.f32.gmra.mrb[0].mxu0 %v339
  %v468 = vpop.f32.mrb[0].mxu0
  %v469 = vadd.f32 %v311, %v468
  %v470 = vpop.f32.mrb[0].mxu0
  %471 = vmatprep.mubr.f32.mxu0 0.0
  %472 = vmatmul.mubr.f32.gmra.mrb[0].mxu0 %v342
  %v473 = vpop.f32.mrb[0].mxu0
  %v474 = vadd.f32 %v311, %v473
  %v475 = vpop.f32.mrb[0].mxu0
  %476 = vmatprep.mubr.f32.mxu0 0.0
  %477 = vmatmul.mubr.f32.gmra.mrb[0].mxu0 %v345
  %v478 = vpop.f32.mrb[0].mxu0
  %v479 = vadd.f32 %v311, %v478
  %v480 = vpop.f32.mrb[0].mxu0
  %481 = vmatprep.mubr.f32.mxu0 0.0
  %482 = vmatmul.mubr.f32.gmra.mrb[0].mxu0 %v348
  %v483 = vpop.f32.mrb[0].mxu0
  %v484 = vadd.f32 %v311, %v483
  %v485 = vpop.f32.mrb[0].mxu0
  %486 = vmatprep.mubr.f32.mxu0 0.0
  %487 = vmatmul.mubr.f32.gmra.mrb[0].mxu0 %v351
  %v488 = vpop.f32.mrb[0].mxu0
  %v489 = vadd.f32 %v311, %v488
  %v490 = vpop.f32.mrb[0].mxu0
  %491 = vmatprep.mubr.f32.mxu0 0.0
  %492 = vmatmul.mubr.f32.gmra.mrb[0].mxu0 %v354
  %v493 = vpop.f32.mrb[0].mxu0
  %v494 = vadd.f32 %v311, %v493
  %v495 = vpop.f32.mrb[0].mxu0
  %496 = vmatprep.mubr.f32.mxu0 0.0
  %497 = vmatmul.mubr.f32.gmra.mrb[0].mxu0 %v357
  %v498 = vpop.f32.mrb[0].mxu0
  %v499 = vadd.f32 %v311, %v498
  %v500 = vpop.f32.mrb[0].mxu0
  %501 = vmatprep.mubr.f32.mxu0 0.0
  %502 = vmatmul.mubr.f32.gmra.mrb[0].mxu0 %v360
  %v503 = vpop.f32.mrb[0].mxu0
  %v504 = vadd.f32 %v311, %v503
  %v505 = vpop.f32.mrb[0].mxu0
  %506 = vdwg.mxu0
  %507 = vst [vmem:[%s5] sm:$0xff] %v429
  %508 = vst [vmem:[%s5 + $0x8] sm:$0xff] %v434
  %509 = vst [vmem:[%s5 + $0x10] sm:$0xff] %v439
  %510 = vst [vmem:[%s5 + $0x18] sm:$0xff] %v444
  %511 = vst [vmem:[%s5 + $0x20] sm:$0xff] %v449
  %512 = vst [vmem:[%s5 + $0x28] sm:$0xff] %v454
  %513 = vst [vmem:[%s5 + $0x30] sm:$0xff] %v459
  %514 = vst [vmem:[%s5 + $0x38] sm:$0xff] %v464
  %515 = vst [vmem:[%s5 + $0x40] sm:$0xff] %v469
  %516 = vst [vmem:[%s5 + $0x48] sm:$0xff] %v474
  %517 = vst [vmem:[%s5 + $0x50] sm:$0xff] %v479
  %518 = vst [vmem:[%s5 + $0x58] sm:$0xff] %v484
  %519 = vst [vmem:[%s5 + $0x60] sm:$0xff] %v489
  %520 = vst [vmem:[%s5 + $0x68] sm:$0xff] %v494
  %521 = vst [vmem:[%s5 + $0x70] sm:$0xff] %v499
  %522 = vst [vmem:[%s5 + $0x78] sm:$0xff] %v504
  // Predicated region
  $region26: #{aevnmt_forward.3} parent=0 // pred_check
    _
  $region27: #{aevnmt_forward.3} parent=0 // pred_check_branch
    %524 = sbr.rel (0) target = $region29
  $region28: #{aevnmt_forward.3} parent=0 // pred_region
    _
  $region29: #{aevnmt_forward.3} parent=0 // pred_fallthru
    _
  // Predicated region
  $region30: #{aevnmt_forward.3} parent=0 // pred_check
    _
  $region31: #{aevnmt_forward.3} parent=0 // pred_check_branch
    %526 = sbr.rel (0) target = $region33
  $region32: #{aevnmt_forward.3} parent=0 // pred_region
    _
  $region33: #{aevnmt_forward.3} parent=0 // pred_fallthru
    _

</llo_original>
